<compile_context>
chip_gen: v7x
topology: tpu7x:2x2x1
jax: 0.10.0
libtpu: 0.0.40
codegen_flags: <defaults>
</compile_context>

<pallas_src>
import functools

import jax
import jax.numpy as jnp
import numpy as np
from jax.experimental import pallas as pl
from jax.experimental.pallas import tpu as pltpu


def _gcn_kernel(a_ref, hw_ref, h0_ref, gamma_ref, beta_ref, o_ref, acc_ref, *,
                eps, tile_k, resident_hw):
    k = pl.program_id(1)

    # --- Aggregation (K-tiled): acc += A[row-block, k-block] @ HW[k-block] ---
    @pl.when(k == 0)
    def _():
        acc_ref[...] = jnp.zeros_like(acc_ref)

    # int8 (0/1) adjacency widened to bf16 on the VPU (hidden under the DMA).
    a = a_ref[...].astype(jnp.bfloat16)
    if resident_hw:
        start = pl.multiple_of(k * tile_k, tile_k)
        hw = hw_ref[pl.ds(start, tile_k), :]
    else:
        hw = hw_ref[...]
    acc_ref[...] += jnp.dot(a, hw, preferred_element_type=jnp.float32)

    # --- Epilogue on the last reduction step (pure VPU/EUP work) ------------
    @pl.when(k == pl.num_programs(1) - 1)
    def _():
        z = jnp.maximum(acc_ref[...], 0.0)              # ReLU, f32 accumulator
        y = z + h0_ref[...].astype(jnp.float32)         # residual

        # LayerNorm over hidden dim (affine).
        mean = jnp.mean(y, axis=-1, keepdims=True)
        cent = y - mean
        var = jnp.mean(cent * cent, axis=-1, keepdims=True)
        y_norm = cent * jax.lax.rsqrt(var + eps)
        out = y_norm * gamma_ref[...] + beta_ref[...]

        # TODO(synk): dropout (p=0.2) skipped — training=False makes it the identity.
        o_ref[...] = out.astype(o_ref.dtype)


def _pick_row_tile(n):
    # Largest tile <= 512 that divides N while keeping >= 2 row programs so the
    # "parallel" axis can feed both v7x TensorCores. Multiples of 32 keep int8
    # sublane tiling (32, 128) happy. Falls back to full N (full-dim block is
    # always legal).
    for t in (512, 256, 128, 64, 32):
        if n % t == 0 and n // t >= 2:
            return t
    return n


def _pick_k_tile(n):
    # Reduction (source-node) tile: lane-aligned multiple of 128, capped at 2048
    # so the A tile DMA (tile_n * tile_k bytes) comfortably covers per-step
    # pipeline overhead.
    for t in (2048, 1024, 512, 256, 128):
        if n % t == 0:
            return t
    return n


def graph_convolution(adj, h, weight, gamma, beta, *, tile_n=None, tile_k=None,
                      eps=1e-5):
    """adj: [N, N] (adj[dst, src]=1), h: [N, D], weight: [D, D] (nn.Linear layout)."""
    n, d = h.shape
    assert adj.shape == (n, n)
    if tile_n is None:
        tile_n = _pick_row_tile(n)
    if tile_k is None:
        tile_k = _pick_k_tile(n)

    assert n % tile_n == 0 and n % tile_k == 0
    assert tile_n % 32 == 0 or tile_n == n, "row tile should respect int8 sublane tiling"
    assert tile_k % 128 == 0 or tile_k == n, "reduction tile must be lane-aligned"
    assert d % 128 == 0, "hidden_dim should be lane-aligned (multiple of 128)"

    # int8 adjacency storage (0/1 exact); widened to bf16 inside the kernel.
    # NOTE: do NOT feed int8 to the MXU directly — v7x has no integer MXU path.
    adj_i8 = adj.astype(jnp.int8)

    # Fold the linear layer into the features (associativity):
    #   relu((A@H) @ W^T) == relu(A @ (H @ W^T)).
    # One XLA matmul in f32, stored bf16 for the kernel's MXU RHS.
    hw_bf16 = (h.astype(jnp.float32) @ weight.T.astype(jnp.float32)).astype(jnp.bfloat16)

    h0_bf16 = h.astype(jnp.bfloat16)            # residual (upcast in epilogue)
    gamma2 = gamma.reshape(1, d).astype(jnp.float32)
    beta2 = beta.reshape(1, d).astype(jnp.float32)

    # Keep HW fully resident in VMEM when it is small; otherwise stream it in
    # (tile_k, d) blocks (the larger tile_n already shrinks the refetch factor).
    resident_hw = n * d * 2 <= 16 * 1024 * 1024
    if resident_hw:
        hw_spec = pl.BlockSpec((n, d), lambda i, k: (0, 0))
    else:
        hw_spec = pl.BlockSpec((tile_k, d), lambda i, k: (k, 0))

    kernel = functools.partial(_gcn_kernel, eps=eps, tile_k=tile_k,
                               resident_hw=resident_hw)

    return pl.pallas_call(
        kernel,
        out_shape=jax.ShapeDtypeStruct((n, d), h.dtype),
        grid_spec=pltpu.PrefetchScalarGridSpec(
            num_scalar_prefetch=0,
            grid=(n // tile_n, n // tile_k),       # (dst row tiles, reduction)
            in_specs=[
                # Adjacency rows: streamed (tile_n, tile_k) int8 tiles,
                # default double-buffering.
                pl.BlockSpec((tile_n, tile_k), lambda i, k: (i, k)),
                # Pre-multiplied features HW (resident or per-reduction-slice).
                hw_spec,
                # Residual rows for this destination block (bf16).
                pl.BlockSpec((tile_n, d), lambda i, k: (i, 0)),
                # LayerNorm affine params (pre-cast to f32 in the wrapper).
                pl.BlockSpec((1, d), lambda i, k: (0, 0)),
                pl.BlockSpec((1, d), lambda i, k: (0, 0)),
            ],
            out_specs=pl.BlockSpec((tile_n, d), lambda i, k: (i, 0)),
            scratch_shapes=[pltpu.VMEM((tile_n, d), jnp.float32)],
        ),
        compiler_params=pltpu.CompilerParams(
            dimension_semantics=("parallel", "arbitrary"),
            # Above the 16/32 MiB scoped defaults, with headroom under v7x's
            # 64 MiB physical VMEM (2 MiB A double-buffer + <=16 MiB resident HW
            # + small residual/output/acc tiles).
            vmem_limit_bytes=48 * 1024 * 1024,
        ),
    )(adj_i8, hw_bf16, h0_bf16, gamma2, beta2)


def _reference(adj, h, weight, gamma, beta, eps=1e-5):
    u = adj.astype(jnp.float32) @ h.astype(jnp.float32)
    z = jnp.maximum(u @ weight.T.astype(jnp.float32), 0.0)
    y = z + h.astype(jnp.float32)
    mean = jnp.mean(y, axis=-1, keepdims=True)
    var = jnp.mean((y - mean) ** 2, axis=-1, keepdims=True)
    yn = (y - mean) / jnp.sqrt(var + eps)
    return yn * gamma + beta


if __name__ == "__main__":
    key = jax.random.PRNGKey(0)
    k_h, k_w, k_a, k_g, k_b = jax.random.split(key, 5)

    N = 256          # number of graph nodes (2 row tiles -> both v7x TCs busy)
    D = 128          # hidden_dim

    # Deterministic synthetic parameters / inputs.
    h = jax.random.normal(k_h, (N, D), dtype=jnp.float32)
    # Linear weight (PyTorch nn.Linear layout: [out_features, in_features]).
    weight = jax.random.normal(k_w, (D, D), dtype=jnp.float32) * (1.0 / np.sqrt(D))
    # LayerNorm affine params (perturbed from ones/zeros to exercise broadcast).
    gamma = 1.0 + 0.1 * jax.random.normal(k_g, (D,), dtype=jnp.float32)
    beta = 0.1 * jax.random.normal(k_b, (D,), dtype=jnp.float32)
    # Random sparse-ish adjacency, A[dst, src] in {0, 1}.
    adj = (jax.random.uniform(k_a, (N, N)) < 0.1).astype(jnp.float32)

    # TODO(synk): at ~10% density a CSR/gather sparse formulation would cut HBM
    # bytes and MXU flops by the density factor — flagged for a future rewrite.

    out = graph_convolution(adj, h, weight, gamma, beta)
    out = jax.block_until_ready(out)

    ref = _reference(adj, h, weight, gamma, beta)
    # bf16 feature/residual operands (f32 accumulation, exact 0/1 adjacency)
    # -> loosen vs. the pure-f32 reference.
    np.testing.assert_allclose(np.asarray(out), np.asarray(ref), rtol=2e-2, atol=5e-2)

    print("KERNEL_OK")
</pallas_src>

<mosaic_0001>
module attributes {stable_mosaic.version = 11 : i64} {
  func.func @_gcn_kernel(%arg0: i32, %arg1: i32, %arg2: memref<128x256xi8, #tpu.memory_space<vmem>>, %arg3: memref<256x128xbf16, #tpu.memory_space<vmem>>, %arg4: memref<128x128xbf16, #tpu.memory_space<vmem>>, %arg5: memref<1x128xf32, #tpu.memory_space<vmem>>, %arg6: memref<1x128xf32, #tpu.memory_space<vmem>>, %arg7: memref<128x128xf32, #tpu.memory_space<vmem>>, %arg8: memref<128x128xf32, #tpu.memory_space<vmem>>) attributes {dimension_semantics = [#tpu.dimension_semantics<parallel>, #tpu.dimension_semantics<arbitrary>], iteration_bounds = array<i64: 2, 1>, scalar_prefetch = 0 : i64, scratch_operands = 1 : i64, tpu.core_type = #tpu.core_type<tc>, window_params = [{transform_indices = @transform_0, window_bounds = array<i64: 128, 256>}, {pipeline_mode = #tpu.pipeline_mode<synchronous>, transform_indices = @transform_1, window_bounds = array<i64: 256, 128>}, {transform_indices = @transform_2, window_bounds = array<i64: 128, 128>}, {pipeline_mode = #tpu.pipeline_mode<synchronous>, transform_indices = @transform_3, window_bounds = array<i64: 1, 128>}, {pipeline_mode = #tpu.pipeline_mode<synchronous>, transform_indices = @transform_4, window_bounds = array<i64: 1, 128>}, {transform_indices = @transform_5, window_bounds = array<i64: 128, 128>}]} {
    %c0_i32 = arith.constant 0 : i32
    %0 = arith.cmpi eq, %arg1, %c0_i32 : i32
    %1 = arith.extui %0 : i1 to i32
    %c0_i32_0 = arith.constant 0 : i32
    %2 = arith.cmpi ne, %1, %c0_i32_0 : i32
    scf.if %2 {
      %cst_9 = arith.constant 0.000000e+00 : f32
      %16 = vector.broadcast %cst_9 : f32 to vector<128x128xf32>
      %c0_10 = arith.constant 0 : index
      %c0_11 = arith.constant 0 : index
      %17 = vector.load %arg8[%c0_10, %c0_11] : memref<128x128xf32, #tpu.memory_space<vmem>>, vector<128x128xf32>
      tpu.vector_store %arg8[%c0_10, %c0_11], %16 {strides = array<i32>} : memref<128x128xf32, #tpu.memory_space<vmem>>, vector<128x128xf32>,
    } else {
    }
    %c0 = arith.constant 0 : index
    %c0_1 = arith.constant 0 : index
    %3 = vector.load %arg2[%c0, %c0_1] : memref<128x256xi8, #tpu.memory_space<vmem>>, vector<128x256xi8>
    %4 = arith.sitofp %3 : vector<128x256xi8> to vector<128x256xbf16>
    %c256_i32 = arith.constant 256 : i32
    %5 = arith.muli %arg1, %c256_i32 : i32
    %6 = tpu.assume_multiple %5, 256 : i32
    %7 = arith.index_cast %6 : i32 to index
    %c0_2 = arith.constant 0 : index
    %8 = vector.load %arg3[%7, %c0_2] : memref<256x128xbf16, #tpu.memory_space<vmem>>, vector<256x128xbf16>
    %c0_3 = arith.constant 0 : index
    %c0_4 = arith.constant 0 : index
    %9 = vector.load %arg8[%c0_3, %c0_4] : memref<128x128xf32, #tpu.memory_space<vmem>>, vector<128x128xf32>
    %cst = arith.constant dense<0.000000e+00> : vector<128x128xf32>
    %10 = tpu.matmul %4, %8, %cst {dimension_numbers = #tpu.dot_dimension_numbers<[1], [0], [0], [1], [0, 0, 1, 1], [], []>} : vector<128x256xbf16>, vector<256x128xbf16>, vector<128x128xf32> -> vector<128x128xf32>
    %11 = arith.addf %9, %10 : vector<128x128xf32>
    %c0_5 = arith.constant 0 : index
    %c0_6 = arith.constant 0 : index
    %12 = vector.load %arg8[%c0_5, %c0_6] : memref<128x128xf32, #tpu.memory_space<vmem>>, vector<128x128xf32>
    tpu.vector_store %arg8[%c0_5, %c0_6], %11 {strides = array<i32>} : memref<128x128xf32, #tpu.memory_space<vmem>>, vector<128x128xf32>,
    %c0_i32_7 = arith.constant 0 : i32
    %13 = arith.cmpi eq, %arg1, %c0_i32_7 : i32
    %14 = arith.extui %13 : i1 to i32
    %c0_i32_8 = arith.constant 0 : i32
    %15 = arith.cmpi ne, %14, %c0_i32_8 : i32
    scf.if %15 {
      %c0_9 = arith.constant 0 : index
      %c0_10 = arith.constant 0 : index
      %16 = vector.load %arg8[%c0_9, %c0_10] : memref<128x128xf32, #tpu.memory_space<vmem>>, vector<128x128xf32>
      %cst_11 = arith.constant 0.000000e+00 : f32
      %17 = vector.broadcast %cst_11 : f32 to vector<128x128xf32>
      %18 = arith.maximumf %16, %17 : vector<128x128xf32>
      %c0_12 = arith.constant 0 : index
      %c0_13 = arith.constant 0 : index
      %19 = vector.load %arg4[%c0_12, %c0_13] : memref<128x128xbf16, #tpu.memory_space<vmem>>, vector<128x128xbf16>
      %20 = arith.extf %19 : vector<128x128xbf16> to vector<128x128xf32>
      %21 = arith.addf %18, %20 : vector<128x128xf32>
      %cst_14 = arith.constant dense<0.000000e+00> : vector<128xf32>
      %22 = vector.multi_reduction <add>, %21, %cst_14 [1] : vector<128x128xf32> to vector<128xf32>
      %23 = vector.shape_cast %22 : vector<128xf32> to vector<128x1xf32>
      %cst_15 = arith.constant 1.280000e+02 : f32
      %24 = vector.broadcast %cst_15 : f32 to vector<128x1xf32>
      %25 = arith.divf %23, %24 : vector<128x1xf32>
      %26 = vector.broadcast %25 : vector<128x1xf32> to vector<128x128xf32>
      %27 = arith.subf %21, %26 : vector<128x128xf32>
      %28 = arith.mulf %27, %27 : vector<128x128xf32>
      %cst_16 = arith.constant dense<0.000000e+00> : vector<128xf32>
      %29 = vector.multi_reduction <add>, %28, %cst_16 [1] : vector<128x128xf32> to vector<128xf32>
      %30 = vector.shape_cast %29 : vector<128xf32> to vector<128x1xf32>
      %cst_17 = arith.constant 1.280000e+02 : f32
      %31 = vector.broadcast %cst_17 : f32 to vector<128x1xf32>
      %32 = arith.divf %30, %31 : vector<128x1xf32>
      %cst_18 = arith.constant 9.99999974E-6 : f32
      %33 = vector.broadcast %cst_18 : f32 to vector<128x1xf32>
      %34 = arith.addf %32, %33 : vector<128x1xf32>
      %35 = math.rsqrt %34 : vector<128x1xf32>
      %36 = vector.broadcast %35 : vector<128x1xf32> to vector<128x128xf32>
      %37 = arith.mulf %27, %36 : vector<128x128xf32>
      %c0_19 = arith.constant 0 : index
      %c0_20 = arith.constant 0 : index
      %38 = vector.load %arg5[%c0_19, %c0_20] : memref<1x128xf32, #tpu.memory_space<vmem>>, vector<1x128xf32>
      %39 = vector.broadcast %38 : vector<1x128xf32> to vector<128x128xf32>
      %40 = arith.mulf %37, %39 : vector<128x128xf32>
      %c0_21 = arith.constant 0 : index
      %c0_22 = arith.constant 0 : index
      %41 = vector.load %arg6[%c0_21, %c0_22] : memref<1x128xf32, #tpu.memory_space<vmem>>, vector<1x128xf32>
      %42 = vector.broadcast %41 : vector<1x128xf32> to vector<128x128xf32>
      %43 = arith.addf %40, %42 : vector<128x128xf32>
      %c0_23 = arith.constant 0 : index
      %c0_24 = arith.constant 0 : index
      %44 = vector.load %arg7[%c0_23, %c0_24] : memref<128x128xf32, #tpu.memory_space<vmem>>, vector<128x128xf32>
      tpu.vector_store %arg7[%c0_23, %c0_24], %43 {strides = array<i32>} : memref<128x128xf32, #tpu.memory_space<vmem>>, vector<128x128xf32>,
    } else {
    }
    return
  }
  func.func @transform_0(%arg0: i32, %arg1: i32) -> (i32, i32) {
    %c0_i32 = arith.constant 0 : i32
    return %arg0, %arg1 : i32, i32
  }
  func.func @transform_1(%arg0: i32, %arg1: i32) -> (i32, i32) {
    %c0_i32 = arith.constant 0 : i32
    %c0_i32_0 = arith.constant 0 : i32
    %c0_i32_1 = arith.constant 0 : i32
    return %c0_i32, %c0_i32_0 : i32, i32
  }
  func.func @transform_2(%arg0: i32, %arg1: i32) -> (i32, i32) {
    %c0_i32 = arith.constant 0 : i32
    %c0_i32_0 = arith.constant 0 : i32
    return %arg0, %c0_i32 : i32, i32
  }
  func.func @transform_3(%arg0: i32, %arg1: i32) -> (i32, i32) {
    %c0_i32 = arith.constant 0 : i32
    %c0_i32_0 = arith.constant 0 : i32
    %c0_i32_1 = arith.constant 0 : i32
    return %c0_i32, %c0_i32_0 : i32, i32
  }
  func.func @transform_4(%arg0: i32, %arg1: i32) -> (i32, i32) {
    %c0_i32 = arith.constant 0 : i32
    %c0_i32_0 = arith.constant 0 : i32
    %c0_i32_1 = arith.constant 0 : i32
    return %c0_i32, %c0_i32_0 : i32, i32
  }
  func.func @transform_5(%arg0: i32, %arg1: i32) -> (i32, i32) {
    %c0_i32 = arith.constant 0 : i32
    %c0_i32_0 = arith.constant 0 : i32
    return %arg0, %c0_i32 : i32, i32
  }
}

</mosaic_0001>

<llo_original>
// kernel: tpu_custom_call.1
$region0: #{tpu_custom_call.1}
  #allocation0 [shape = 'u32[]', space=smem, size = 0x4, offset = 0x4, fixed_abs, tag = 'smem constant byte address 0x4 - core index']
  #allocation1 [shape = 'u32[144,128]{1,0:T(1,128)}', space=vmem, size = 0x12000, scoped, tag = 'internal scratch']
  #allocation2 [shape = 'f32[128,128]{1,0:T(8,128)}', space=vmem, size = 0x10000, scoped, tag = 'scratch operand']
  %s0 = inlined_call_operand.hbm [shape: s8[256,256], index: 0, kind: input, shape index: {}]
  %s1 = inlined_call_operand.hbm [shape: bf16[256,128], index: 1, kind: input, shape index: {}]
  %s2 = inlined_call_operand.hbm [shape: bf16[256,128], index: 2, kind: input, shape index: {}]
  %s3 = inlined_call_operand.vmem [shape: f32[1,128], index: 3, kind: input, shape index: {}]
  %s4 = inlined_call_operand.vmem [shape: f32[1,128], index: 4, kind: input, shape index: {}]
  %s5 = inlined_call_operand.hbm [shape: f32[256,128], index: 5, kind: output, shape index: {}]
  %s6 = sld [smem:[#allocation0]]
  $region73: #{tpu_custom_call.1} parent=0
    _
  %s8 = ssub.s32 1, %s6
  %s9 = scalar_select 0, %s8, %s6
  $region1: #{tpu_custom_call.1} parent=0
    #allocation3 [shape = 'u8[65536]{0}', space=vmem, size = 0x10000, scoped, tag = 'input window, operand 0']
    #allocation4 [shape = 's32[2]{0}', space=sflag, size = 0x8, scoped, tag = 'scoped memory for tpu_custom_call.1']
    #allocation5 [shape = 's32[2]{0}', space=sflag, size = 0x8, scoped, tag = 'scoped memory for tpu_custom_call.1']
    #allocation6 [shape = 'u8[65536]{0}', space=vmem, size = 0x10000, scoped, tag = 'input window, operand 1, single buffered']
    #allocation7 [shape = 's32[1]{0}', space=sflag, size = 0x4, scoped, tag = 'scoped memory for tpu_custom_call.1']
    #allocation8 [shape = 'u8[65536]{0}', space=vmem, size = 0x10000, scoped, tag = 'input window, operand 2']
    #allocation9 [shape = 'u8[131072]{0}', space=vmem, size = 0x20000, scoped, tag = 'output window, operand 0']
    %10 = vsyncpa [#allocation4], 0
    %s11 = scalar_lea.sflag [#allocation4], 1
    %12 = vsyncpa %s11, 0
    %13 = vsyncpa [#allocation7], 0
    %14 = vsyncpa [#allocation5], 0
    %s15 = scalar_lea.sflag [#allocation5], 1
    %16 = vsyncpa %s15, 0
    loop: start=0, step=1, limit=4
    $region2: #{tpu_custom_call.1} parent=1 // loop_pre_header
      _
    $region3: #{tpu_custom_call.1} parent=1 // loop_header
      %s18 = sphi 0, %s22
      %p19 = scmp.ge.s32.totalorder %s18, 4
      %s25 = sphi 0, %s37
      %s26 = sphi 0, %s33
      %s27 = sphi 0, %s25
      %s28 = sphi 0, %s26
      %s29 = sphi 0, %s27
      %s30 = sphi 0, %s28
      %s42 = sphi 0, %s44
      %s45 = sphi 0, %s42
      %s46 = sphi 0, %s45
      %s62 = sphi 0, %s46
      %s66 = sphi 0, %s66
      %s68 = sphi 0, %s66
      %s69 = sphi 0, %s68
      %s83 = sphi 0, %s69
      %s89 = sphi 0, %s91
      %s92 = sphi 0, %s89
      %s93 = sphi 0, %s92
      %s109 = sphi 0, %s93
      %s113 = sphi 0, %s113
      %s115 = sphi 0, %s113
      %s116 = sphi 0, %s115
      %s130 = sphi 0, %s116
      %s134 = sphi 0, %s134
      %s136 = sphi 0, %s134
      %s137 = sphi 0, %s136
      %s151 = sphi 0, %s137
      %s157 = sphi 0, %s159
      %s160 = sphi 0, %s157
      %s161 = sphi 0, %s160
      %s177 = sphi 0, %s161
    $region4: #{tpu_custom_call.1} parent=1 // loop_header_branch
      %21 = sbr.rel (%p19) target = $region8
    $region5: #{tpu_custom_call.1} parent=1 // loop_body
      %s23 = ssub.s32 %s18, 1
      %s24 = ssub.s32 %s18, 2
      %s31 = sadd.s32 1, %s26
      %p32 = scmp.ge.s32.totalorder %s31, 1
      %s33 = scalar_select %p32, 0, %s31
      %s34 = sadd.s32 1, %s25
      %s35 = scalar_select %p32, %s34, %s25
      %p36 = scmp.ge.s32.totalorder %s35, 2
      %s37 = scalar_select %p36, 0, %s35
      %s38 = ssub.s32 %s25, %s37
      %s39 = ssub.s32 %s26, %s33
      %s40 = sor.u32 %s38, %s39
      %p41 = scmp.eq.s32.totalorder %s40, 0
      %s43 = sadd.s32 %s42, 1
      %s44 = scalar_select %p41, %s42, %s43
      %p47 = pneg %p41
      %p48 = scmp.eq.s32.totalorder %s18, 1
      %p49 = por %p47, %p48
      %p50 = scmp.ne.s32.totalorder %s42, %s45
      %p51 = scmp.eq.s32.totalorder %s18, 0
      %p52 = por %p50, %p51
      %p53 = scmp.ne.s32.totalorder %s42, %s45
      %p54 = scmp.eq.s32.totalorder %s23, 1
      %p55 = por %p53, %p54
      %p56 = scmp.ne.s32.totalorder %s45, %s46
      %p57 = scmp.eq.s32.totalorder %s23, 0
      %p58 = por %p56, %p57
      %p59 = scmp.ne.s32.totalorder %s45, %s46
      %p60 = scmp.eq.s32.totalorder %s24, 1
      %p61 = por %p59, %p60
      %p63 = scmp.ne.s32.totalorder %s46, %s62
      %p64 = scmp.eq.s32.totalorder %s24, 0
      %p65 = por %p63, %p64
      %s67 = sadd.s32 %s66, 1
      %p70 = scmp.eq.s32.totalorder %s18, 1
      %p71 = scmp.ne.s32.totalorder %s66, %s68
      %p72 = scmp.eq.s32.totalorder %s18, 0
      %p73 = por %p71, %p72
      %p74 = scmp.ne.s32.totalorder %s66, %s68
      %p75 = scmp.eq.s32.totalorder %s23, 1
      %p76 = por %p74, %p75
      %p77 = scmp.ne.s32.totalorder %s68, %s69
      %p78 = scmp.eq.s32.totalorder %s23, 0
      %p79 = por %p77, %p78
      %p80 = scmp.ne.s32.totalorder %s68, %s69
      %p81 = scmp.eq.s32.totalorder %s24, 1
      %p82 = por %p80, %p81
      %p84 = scmp.ne.s32.totalorder %s69, %s83
      %p85 = scmp.eq.s32.totalorder %s24, 0
      %p86 = por %p84, %p85
      %s87 = ssub.s32 %s25, %s37
      %p88 = scmp.eq.s32.totalorder %s87, 0
      %s90 = sadd.s32 %s89, 1
      %s91 = scalar_select %p88, %s89, %s90
      %p94 = pneg %p88
      %p95 = scmp.eq.s32.totalorder %s18, 1
      %p96 = por %p94, %p95
      %p97 = scmp.ne.s32.totalorder %s89, %s92
      %p98 = scmp.eq.s32.totalorder %s18, 0
      %p99 = por %p97, %p98
      %p100 = scmp.ne.s32.totalorder %s89, %s92
      %p101 = scmp.eq.s32.totalorder %s23, 1
      %p102 = por %p100, %p101
      %p103 = scmp.ne.s32.totalorder %s92, %s93
      %p104 = scmp.eq.s32.totalorder %s23, 0
      %p105 = por %p103, %p104
      %p106 = scmp.ne.s32.totalorder %s92, %s93
      %p107 = scmp.eq.s32.totalorder %s24, 1
      %p108 = por %p106, %p107
      %p110 = scmp.ne.s32.totalorder %s93, %s109
      %p111 = scmp.eq.s32.totalorder %s24, 0
      %p112 = por %p110, %p111
      %s114 = sadd.s32 %s113, 1
      %p117 = scmp.eq.s32.totalorder %s18, 1
      %p118 = scmp.ne.s32.totalorder %s113, %s115
      %p119 = scmp.eq.s32.totalorder %s18, 0
      %p120 = por %p118, %p119
      %p121 = scmp.ne.s32.totalorder %s113, %s115
      %p122 = scmp.eq.s32.totalorder %s23, 1
      %p123 = por %p121, %p122
      %p124 = scmp.ne.s32.totalorder %s115, %s116
      %p125 = scmp.eq.s32.totalorder %s23, 0
      %p126 = por %p124, %p125
      %p127 = scmp.ne.s32.totalorder %s115, %s116
      %p128 = scmp.eq.s32.totalorder %s24, 1
      %p129 = por %p127, %p128
      %p131 = scmp.ne.s32.totalorder %s116, %s130
      %p132 = scmp.eq.s32.totalorder %s24, 0
      %p133 = por %p131, %p132
      %s135 = sadd.s32 %s134, 1
      %p138 = scmp.eq.s32.totalorder %s18, 1
      %p139 = scmp.ne.s32.totalorder %s134, %s136
      %p140 = scmp.eq.s32.totalorder %s18, 0
      %p141 = por %p139, %p140
      %p142 = scmp.ne.s32.totalorder %s134, %s136
      %p143 = scmp.eq.s32.totalorder %s23, 1
      %p144 = por %p142, %p143
      %p145 = scmp.ne.s32.totalorder %s136, %s137
      %p146 = scmp.eq.s32.totalorder %s23, 0
      %p147 = por %p145, %p146
      %p148 = scmp.ne.s32.totalorder %s136, %s137
      %p149 = scmp.eq.s32.totalorder %s24, 1
      %p150 = por %p148, %p149
      %p152 = scmp.ne.s32.totalorder %s137, %s151
      %p153 = scmp.eq.s32.totalorder %s24, 0
      %p154 = por %p152, %p153
      %s155 = ssub.s32 %s25, %s37
      %p156 = scmp.eq.s32.totalorder %s155, 0
      %s158 = sadd.s32 %s157, 1
      %s159 = scalar_select %p156, %s157, %s158
      %p162 = pneg %p156
      %p163 = scmp.eq.s32.totalorder %s18, 1
      %p164 = por %p162, %p163
      %p165 = scmp.ne.s32.totalorder %s157, %s160
      %p166 = scmp.eq.s32.totalorder %s18, 0
      %p167 = por %p165, %p166
      %p168 = scmp.ne.s32.totalorder %s157, %s160
      %p169 = scmp.eq.s32.totalorder %s23, 1
      %p170 = por %p168, %p169
      %p171 = scmp.ne.s32.totalorder %s160, %s161
      %p172 = scmp.eq.s32.totalorder %s23, 0
      %p173 = por %p171, %p172
      %p174 = scmp.ne.s32.totalorder %s160, %s161
      %p175 = scmp.eq.s32.totalorder %s24, 1
      %p176 = por %p174, %p175
      %p178 = scmp.ne.s32.totalorder %s161, %s177
      %p179 = scmp.eq.s32.totalorder %s24, 0
      %p180 = por %p178, %p179
      %p181 = scmp.le.s32.totalorder 1, %s18
      %p182 = scmp.lt.s32.totalorder %s18, 3
      %p183 = pnand %p181, %p182
      %p184 = pneg %p183
      // Predicated region
      $region9: #{tpu_custom_call.1} parent=5 // pred_check
        _
      $region10: #{tpu_custom_call.1} parent=5 // pred_check_branch
        %186 = sbr.rel (%p183) target = $region12
      $region11: #{tpu_custom_call.1} parent=5 // pred_region
        %s187 = ssub.s32 %s18, 1
        // Predicated region
        $region13: #{tpu_custom_call.1} parent=11 // pred_check
          %p188 = pneg %p79
        $region14: #{tpu_custom_call.1} parent=11 // pred_check_branch
          %190 = sbr.rel (%p188) target = $region16
        $region15: #{tpu_custom_call.1} parent=11 // pred_region
          %s192 = ssub.s32 2048, 2048
          %193 = vsyncadd [#allocation7], %s192
          %s194 = sshll.u32 [#allocation6], 4
          %s195 = int_to_ptr.vmem [resolvable:$true] %s194
          %200 = dma.hbm_to_vmem [thread:$0]  %s1, 2048, %s195, [#allocation7], 64, 64, 4
        $region16: #{tpu_custom_call.1} parent=11 // pred_fallthru
          _
        // Predicated region
        $region17: #{tpu_custom_call.1} parent=11 // pred_check
          %p201 = pneg %p126
        $region18: #{tpu_custom_call.1} parent=11 // pred_check_branch
          %203 = sbr.rel (%p201) target = $region20
        $region19: #{tpu_custom_call.1} parent=11 // pred_region
          _
        $region20: #{tpu_custom_call.1} parent=11 // pred_fallthru
          _
        // Predicated region
        $region21: #{tpu_custom_call.1} parent=11 // pred_check
          %p204 = pneg %p147
        $region22: #{tpu_custom_call.1} parent=11 // pred_check_branch
          %206 = sbr.rel (%p204) target = $region24
        $region23: #{tpu_custom_call.1} parent=11 // pred_region
          _
        $region24: #{tpu_custom_call.1} parent=11 // pred_fallthru
          _
      $region12: #{tpu_custom_call.1} parent=5 // pred_fallthru
        _
      %p207 = scmp.lt.s32.totalorder %s18, 2
      // Predicated region
      $region25: #{tpu_custom_call.1} parent=5 // pred_check
        %p208 = pneg %p207
      $region26: #{tpu_custom_call.1} parent=5 // pred_check_branch
        %210 = sbr.rel (%p208) target = $region28
      $region27: #{tpu_custom_call.1} parent=5 // pred_region
        // Predicated region
        $region29: #{tpu_custom_call.1} parent=27 // pred_check
          %p211 = pneg %p52
        $region30: #{tpu_custom_call.1} parent=27 // pred_check_branch
          %213 = sbr.rel (%p211) target = $region32
        $region31: #{tpu_custom_call.1} parent=27 // pred_region
          %s214 = sand.u32 %s18, 1
          %s215 = scalar_lea.sflag [#allocation4], %s214
          %s216 = sand.u32 %s42, 1
          %s217 = smul.addr %s216, 64
          %s218 = scalar_lea.vmem [#allocation3], %s217
          %s219 = smul.u32 4, %s25
          %s220 = smul.u32 2, %s26
          %s222 = ssub.s32 1024, 1024
          %223 = vsyncadd %s215, %s222
          %s224 = smul.addr %s219, 2
          %s225 = sadd.s32 %s220, %s224
          %s226 = smul.addr %s225, 128
          %s227 = scalar_lea.hbm %s0, %s226
          %s228 = sshll.u32 %s218, 4
          %s229 = int_to_ptr.vmem [resolvable:$true] %s228
          %234 = dma.hbm_to_vmem [thread:$0]  %s227, 1024, %s229, %s215, 256, 256, 16
        $region32: #{tpu_custom_call.1} parent=27 // pred_fallthru
          _
        // Predicated region
        $region33: #{tpu_custom_call.1} parent=27 // pred_check
          %p235 = pneg %p99
        $region34: #{tpu_custom_call.1} parent=27 // pred_check_branch
          %237 = sbr.rel (%p235) target = $region36
        $region35: #{tpu_custom_call.1} parent=27 // pred_region
          %s238 = sand.u32 %s18, 1
          %s239 = scalar_lea.sflag [#allocation4], %s238
          %s240 = sand.u32 %s89, 1
          %s241 = smul.addr %s240, 64
          %s242 = scalar_lea.vmem [#allocation8], %s241
          %s243 = smul.u32 16, %s25
          %s245 = ssub.s32 1024, 1024
          %246 = vsyncadd %s239, %s245
          %s247 = smul.addr %s243, 64
          %s248 = scalar_lea.hbm %s2, %s247
          %s249 = sshll.u32 %s242, 4
          %s250 = int_to_ptr.vmem [resolvable:$true] %s249
          %255 = dma.hbm_to_vmem [thread:$0]  %s248, 1024, %s250, %s239, 64, 64, 4
        $region36: #{tpu_custom_call.1} parent=27 // pred_fallthru
          _
      $region28: #{tpu_custom_call.1} parent=5 // pred_fallthru
        _
      %p256 = scmp.le.s32.totalorder 1, %s18
      %p257 = scmp.lt.s32.totalorder %s18, 3
      %p258 = pnand %p256, %p257
      %p259 = pneg %p258
      // Predicated region
      $region37: #{tpu_custom_call.1} parent=5 // pred_check
        _
      $region38: #{tpu_custom_call.1} parent=5 // pred_check_branch
        %261 = sbr.rel (%p258) target = $region40
      $region39: #{tpu_custom_call.1} parent=5 // pred_region
        %s262 = ssub.s32 %s18, 1
        %s263 = sand.u32 %s23, 1
        %s264 = scalar_lea.sflag [#allocation4], %s263
        %s265 = sand.u32 %s45, 1
        %s266 = smul.addr %s265, 64
        %s267 = scalar_lea.vmem [#allocation3], %s266
        // Predicated region
        $region41: #{tpu_custom_call.1} parent=39 // pred_check
          %p268 = pneg %p58
        $region42: #{tpu_custom_call.1} parent=39 // pred_check_branch
          %270 = sbr.rel (%p268) target = $region44
        $region43: #{tpu_custom_call.1} parent=39 // pred_region
          %271 = dma.done %s264, 1024
        $region44: #{tpu_custom_call.1} parent=39 // pred_fallthru
          _
        // Predicated region
        $region45: #{tpu_custom_call.1} parent=39 // pred_check
          %p272 = pneg %p79
        $region46: #{tpu_custom_call.1} parent=39 // pred_check_branch
          %274 = sbr.rel (%p272) target = $region48
        $region47: #{tpu_custom_call.1} parent=39 // pred_region
          %275 = dma.done [#allocation7], 2048
        $region48: #{tpu_custom_call.1} parent=39 // pred_fallthru
          _
        %s276 = sand.u32 %s23, 1
        %s277 = scalar_lea.sflag [#allocation4], %s276
        %s278 = sand.u32 %s92, 1
        %s279 = smul.addr %s278, 64
        %s280 = scalar_lea.vmem [#allocation8], %s279
        // Predicated region
        $region49: #{tpu_custom_call.1} parent=39 // pred_check
          %p281 = pneg %p105
        $region50: #{tpu_custom_call.1} parent=39 // pred_check_branch
          %283 = sbr.rel (%p281) target = $region52
        $region51: #{tpu_custom_call.1} parent=39 // pred_region
          %284 = dma.done %s277, 1024
        $region52: #{tpu_custom_call.1} parent=39 // pred_fallthru
          _
        %s285 = sand.u32 %s23, 1
        %s286 = scalar_lea.sflag [#allocation4], %s285
        %s287 = sand.u32 %s45, 1
        %s288 = smul.addr %s287, 64
        %s289 = scalar_lea.vmem [#allocation3], %s288
        %p290 = pneg %p58
        %p291 = pneg %p55
        %p292 = pneg %p79
        %p293 = pneg %p76
        %s294 = sand.u32 %s23, 1
        %s295 = scalar_lea.sflag [#allocation4], %s294
        %s296 = sand.u32 %s92, 1
        %s297 = smul.addr %s296, 64
        %s298 = scalar_lea.vmem [#allocation8], %s297
        %p299 = pneg %p105
        %p300 = pneg %p102
        %p301 = pneg %p126
        %p302 = pneg %p123
        %p303 = pneg %p147
        %p304 = pneg %p144
        %p305 = pneg %p173
        %p306 = pneg %p170
        %s307 = sand.u32 %s160, 1
        %s308 = scalar_lea.sflag [#allocation5], %s307
        %s309 = sand.u32 %s160, 1
        %s310 = smul.addr %s309, 128
        %s311 = scalar_lea.vmem [#allocation9], %s310
        %s312 = smul.u32 4, %s27
        %s313 = smul.u32 2, %s28
        %s314 = smul.u32 16, %s27
        %s315 = smul.u32 16, %s27
        %p317 = scmp.eq.s32.totalorder %s28, 0
        // Predicated region
        $region53: #{tpu_custom_call.1} parent=39 // pred_check
          %p318 = pneg %p317
        $region54: #{tpu_custom_call.1} parent=39 // pred_check_branch
          %320 = sbr.rel (%p318) target = $region56
        $region55: #{tpu_custom_call.1} parent=39 // pred_region
          %321 = vst [vmem:[#allocation2] sm:$0xff] 0.0
          %322 = vst [vmem:[#allocation2 + $0x8] sm:$0xff] 0.0
          %323 = vst [vmem:[#allocation2 + $0x10] sm:$0xff] 0.0
          %324 = vst [vmem:[#allocation2 + $0x18] sm:$0xff] 0.0
          %325 = vst [vmem:[#allocation2 + $0x20] sm:$0xff] 0.0
          %326 = vst [vmem:[#allocation2 + $0x28] sm:$0xff] 0.0
          %327 = vst [vmem:[#allocation2 + $0x30] sm:$0xff] 0.0
          %328 = vst [vmem:[#allocation2 + $0x38] sm:$0xff] 0.0
          %329 = vst [vmem:[#allocation2 + $0x40] sm:$0xff] 0.0
          %330 = vst [vmem:[#allocation2 + $0x48] sm:$0xff] 0.0
          %331 = vst [vmem:[#allocation2 + $0x50] sm:$0xff] 0.0
          %332 = vst [vmem:[#allocation2 + $0x58] sm:$0xff] 0.0
          %333 = vst [vmem:[#allocation2 + $0x60] sm:$0xff] 0.0
          %334 = vst [vmem:[#allocation2 + $0x68] sm:$0xff] 0.0
          %335 = vst [vmem:[#allocation2 + $0x70] sm:$0xff] 0.0
          %336 = vst [vmem:[#allocation2 + $0x78] sm:$0xff] 0.0
        $region56: #{tpu_custom_call.1} parent=39 // pred_fallthru
          _
        %v337 = vld [vmem:[%s267] sm:$0xff]
        %v338 = vld [vmem:[%s267 + $0x8] sm:$0xff]
        %v339 = vld [vmem:[%s267 + $0x10] sm:$0xff]
        %v340 = vld [vmem:[%s267 + $0x18] sm:$0xff]
        %v341 = vld [vmem:[%s267 + $0x20] sm:$0xff]
        %v342 = vld [vmem:[%s267 + $0x28] sm:$0xff]
        %v343 = vld [vmem:[%s267 + $0x30] sm:$0xff]
        %v344 = vld [vmem:[%s267 + $0x38] sm:$0xff]
        %v345 = vunpack.c.l.s8.bf16 %v337
        %v346 = vunpack.c.l.s8.bf16 %v338
        %v347 = vunpack.c.h.s8.bf16 %v337
        %v348 = vunpack.c.h.s8.bf16 %v338
        %v349 = vunpack.c.l.s8.bf16 %v339
        %v350 = vunpack.c.l.s8.bf16 %v340
        %v351 = vunpack.c.h.s8.bf16 %v339
        %v352 = vunpack.c.h.s8.bf16 %v340
        %v353 = vunpack.c.l.s8.bf16 %v341
        %v354 = vunpack.c.l.s8.bf16 %v342
        %v355 = vunpack.c.h.s8.bf16 %v341
        %v356 = vunpack.c.h.s8.bf16 %v342
        %v357 = vunpack.c.l.s8.bf16 %v343
        %v358 = vunpack.c.l.s8.bf16 %v344
        %v359 = vunpack.c.h.s8.bf16 %v343
        %v360 = vunpack.c.h.s8.bf16 %v344
        %s361 = smul.u32 %s28, 256
        %s362 = sshra.s32 %s361, 3
        %s363 = sand.u32 %s361, 7
        %s364 = smul.addr %s362, 4
        %s365 = scalar_lea.vmem [#allocation6], %s364
        %v366 = vld [vmem:[%s365] sm:$0xf]
        %v367 = vld [vmem:[%s365 + $0x4] sm:$0xf]
        %v368 = vld [vmem:[%s365 + $0x8] sm:$0xf]
        %v369 = vld [vmem:[%s365 + $0xc] sm:$0xf]
        %v370 = vld [vmem:[%s365 + $0x10] sm:$0xf]
        %v371 = vld [vmem:[%s365 + $0x14] sm:$0xf]
        %v372 = vld [vmem:[%s365 + $0x18] sm:$0xf]
        %v373 = vld [vmem:[%s365 + $0x1c] sm:$0xf]
        %v374 = vld [vmem:[%s365 + $0x20] sm:$0xf]
        %v375 = vld [vmem:[%s365 + $0x24] sm:$0xf]
        %v376 = vld [vmem:[%s365 + $0x28] sm:$0xf]
        %v377 = vld [vmem:[%s365 + $0x2c] sm:$0xf]
        %v378 = vld [vmem:[%s365 + $0x30] sm:$0xf]
        %v379 = vld [vmem:[%s365 + $0x34] sm:$0xf]
        %v380 = vld [vmem:[%s365 + $0x38] sm:$0xf]
        %v381 = vld [vmem:[%s365 + $0x3c] sm:$0xf]
        %v382 = vld [vmem:[%s365 + $0x40] sm:$0xf]
        %v383 = vld [vmem:[%s365 + $0x44] sm:$0xf]
        %v384 = vld [vmem:[%s365 + $0x48] sm:$0xf]
        %v385 = vld [vmem:[%s365 + $0x4c] sm:$0xf]
        %v386 = vld [vmem:[%s365 + $0x50] sm:$0xf]
        %v387 = vld [vmem:[%s365 + $0x54] sm:$0xf]
        %v388 = vld [vmem:[%s365 + $0x58] sm:$0xf]
        %v389 = vld [vmem:[%s365 + $0x5c] sm:$0xf]
        %v390 = vld [vmem:[%s365 + $0x60] sm:$0xf]
        %v391 = vld [vmem:[%s365 + $0x64] sm:$0xf]
        %v392 = vld [vmem:[%s365 + $0x68] sm:$0xf]
        %v393 = vld [vmem:[%s365 + $0x6c] sm:$0xf]
        %v394 = vld [vmem:[%s365 + $0x70] sm:$0xf]
        %v395 = vld [vmem:[%s365 + $0x74] sm:$0xf]
        %v396 = vld [vmem:[%s365 + $0x78] sm:$0xf]
        %v397 = vld [vmem:[%s365 + $0x7c] sm:$0xf]
        %v398 = vld [vmem:[#allocation2] sm:$0xff]
        %v399 = vld [vmem:[#allocation2 + $0x8] sm:$0xff]
        %v400 = vld [vmem:[#allocation2 + $0x10] sm:$0xff]
        %v401 = vld [vmem:[#allocation2 + $0x18] sm:$0xff]
        %v402 = vld [vmem:[#allocation2 + $0x20] sm:$0xff]
        %v403 = vld [vmem:[#allocation2 + $0x28] sm:$0xff]
        %v404 = vld [vmem:[#allocation2 + $0x30] sm:$0xff]
        %v405 = vld [vmem:[#allocation2 + $0x38] sm:$0xff]
        %v406 = vld [vmem:[#allocation2 + $0x40] sm:$0xff]
        %v407 = vld [vmem:[#allocation2 + $0x48] sm:$0xff]
        %v408 = vld [vmem:[#allocation2 + $0x50] sm:$0xff]
        %v409 = vld [vmem:[#allocation2 + $0x58] sm:$0xff]
        %v410 = vld [vmem:[#allocation2 + $0x60] sm:$0xff]
        %v411 = vld [vmem:[#allocation2 + $0x68] sm:$0xff]
        %v412 = vld [vmem:[#allocation2 + $0x70] sm:$0xff]
        %v413 = vld [vmem:[#allocation2 + $0x78] sm:$0xff]
        %v446 = vunpack.c.l.b16 %v366
        %v447 = vunpack.c.l.b16 %v367
        %v448 = vunpack.c.l.b16 %v368
        %v449 = vunpack.c.l.b16 %v369
        %v450 = vunpack.c.l.b16 %v370
        %v451 = vunpack.c.l.b16 %v371
        %v452 = vunpack.c.l.b16 %v372
        %v453 = vunpack.c.l.b16 %v373
        %v454 = vunpack.c.l.b16 %v374
        %v455 = vunpack.c.l.b16 %v375
        %v456 = vunpack.c.l.b16 %v376
        %v457 = vunpack.c.l.b16 %v377
        %v458 = vunpack.c.l.b16 %v378
        %v459 = vunpack.c.l.b16 %v379
        %v460 = vunpack.c.l.b16 %v380
        %v461 = vunpack.c.l.b16 %v381
        %v462 = vunpack.c.l.b16 %v382
        %v463 = vunpack.c.l.b16 %v383
        %v464 = vunpack.c.l.b16 %v384
        %v465 = vunpack.c.l.b16 %v385
        %v466 = vunpack.c.l.b16 %v386
        %v467 = vunpack.c.l.b16 %v387
        %v468 = vunpack.c.l.b16 %v388
        %v469 = vunpack.c.l.b16 %v389
        %v470 = vunpack.c.l.b16 %v390
        %v471 = vunpack.c.l.b16 %v391
        %v472 = vunpack.c.l.b16 %v392
        %v473 = vunpack.c.l.b16 %v393
        %v474 = vunpack.c.l.b16 %v394
        %v475 = vunpack.c.l.b16 %v395
        %v476 = vunpack.c.l.b16 %v396
        %v477 = vunpack.c.l.b16 %v397
        %v478 = vpack.c.b16 %v447, %v446
        %v479 = vpack.c.b16 %v449, %v448
        %v480 = vpack.c.b16 %v451, %v450
        %v481 = vpack.c.b16 %v453, %v452
        %v482 = vpack.c.b16 %v455, %v454
        %v483 = vpack.c.b16 %v457, %v456
        %v484 = vpack.c.b16 %v459, %v458
        %v485 = vpack.c.b16 %v461, %v460
        %v486 = vpack.c.b16 %v463, %v462
        %v487 = vpack.c.b16 %v465, %v464
        %v488 = vpack.c.b16 %v467, %v466
        %v489 = vpack.c.b16 %v469, %v468
        %v490 = vpack.c.b16 %v471, %v470
        %v491 = vpack.c.b16 %v473, %v472
        %v492 = vpack.c.b16 %v475, %v474
        %v493 = vpack.c.b16 %v477, %v476
        %510 = vmatprep.subr.bf16.mxu0 0
        %511 = vmatpush1.bf16.msra.mxu0 %v478
        %512 = vmatprep.subr.bf16.mxu0 0
        %513 = vmatpush1.bf16.msra.mxu0 %v479
        %514 = vmatprep.subr.bf16.mxu0 0
        %515 = vmatpush1.bf16.msra.mxu0 %v480
        %516 = vmatprep.subr.bf16.mxu0 0
        %517 = vmatpush1.bf16.msra.mxu0 %v481
        %518 = vmatprep.subr.bf16.mxu0 0
        %519 = vmatpush1.bf16.msra.mxu0 %v482
        %520 = vmatprep.subr.bf16.mxu0 0
        %521 = vmatpush1.bf16.msra.mxu0 %v483
        %522 = vmatprep.subr.bf16.mxu0 0
        %523 = vmatpush1.bf16.msra.mxu0 %v484
        %524 = vmatprep.subr.bf16.mxu0 0
        %525 = vmatpush1.bf16.msra.mxu0 %v485
        %526 = vmatprep.subr.bf16.mxu0 0
        %527 = vmatpush1.bf16.msra.mxu0 %v486
        %528 = vmatprep.subr.bf16.mxu0 0
        %529 = vmatpush1.bf16.msra.mxu0 %v487
        %530 = vmatprep.subr.bf16.mxu0 0
        %531 = vmatpush1.bf16.msra.mxu0 %v488
        %532 = vmatprep.subr.bf16.mxu0 0
        %533 = vmatpush1.bf16.msra.mxu0 %v489
        %534 = vmatprep.subr.bf16.mxu0 0
        %535 = vmatpush1.bf16.msra.mxu0 %v490
        %536 = vmatprep.subr.bf16.mxu0 0
        %537 = vmatpush1.bf16.msra.mxu0 %v491
        %538 = vmatprep.subr.bf16.mxu0 0
        %539 = vmatpush1.bf16.msra.mxu0 %v492
        %540 = vmatprep.subr.bf16.mxu0 0
        %541 = vmatpush1.bf16.msra.mxu0 %v493
        %542 = vmatprep.mubr.bf16.mxu0 %v346
        %543 = vmatmul.mubr.bf16.gmra.mrb[0].mxu0 %v345
        %v544 = vpop.f32.mrb[0].mxu0
        %v545 = vadd.f32 0.0, %v544
        %v546 = vpop.f32.mrb[0].mxu0
        %v547 = vpop.f32.mrb[0].mxu0
        %v548 = vadd.f32 0.0, %v547
        %v549 = vpop.f32.mrb[0].mxu0
        %550 = vmatprep.mubr.bf16.mxu0 %v348
        %551 = vmatmul.mubr.bf16.gmra.mrb[0].mxu0 %v347
        %v552 = vpop.f32.mrb[0].mxu0
        %v553 = vadd.f32 0.0, %v552
        %v554 = vpop.f32.mrb[0].mxu0
        %v555 = vpop.f32.mrb[0].mxu0
        %v556 = vadd.f32 0.0, %v555
        %v557 = vpop.f32.mrb[0].mxu0
        %558 = vmatprep.mubr.bf16.mxu0 %v350
        %559 = vmatmul.mubr.bf16.gmra.mrb[0].mxu0 %v349
        %v560 = vpop.f32.mrb[0].mxu0
        %v561 = vadd.f32 0.0, %v560
        %v562 = vpop.f32.mrb[0].mxu0
        %v563 = vpop.f32.mrb[0].mxu0
        %v564 = vadd.f32 0.0, %v563
        %v565 = vpop.f32.mrb[0].mxu0
        %566 = vmatprep.mubr.bf16.mxu0 %v352
        %567 = vmatmul.mubr.bf16.gmra.mrb[0].mxu0 %v351
        %v568 = vpop.f32.mrb[0].mxu0
        %v569 = vadd.f32 0.0, %v568
        %v570 = vpop.f32.mrb[0].mxu0
        %v571 = vpop.f32.mrb[0].mxu0
        %v572 = vadd.f32 0.0, %v571
        %v573 = vpop.f32.mrb[0].mxu0
        %574 = vmatprep.mubr.bf16.mxu0 %v354
        %575 = vmatmul.mubr.bf16.gmra.mrb[0].mxu0 %v353
        %v576 = vpop.f32.mrb[0].mxu0
        %v577 = vadd.f32 0.0, %v576
        %v578 = vpop.f32.mrb[0].mxu0
        %v579 = vpop.f32.mrb[0].mxu0
        %v580 = vadd.f32 0.0, %v579
        %v581 = vpop.f32.mrb[0].mxu0
        %582 = vmatprep.mubr.bf16.mxu0 %v356
        %583 = vmatmul.mubr.bf16.gmra.mrb[0].mxu0 %v355
        %v584 = vpop.f32.mrb[0].mxu0
        %v585 = vadd.f32 0.0, %v584
        %v586 = vpop.f32.mrb[0].mxu0
        %v587 = vpop.f32.mrb[0].mxu0
        %v588 = vadd.f32 0.0, %v587
        %v589 = vpop.f32.mrb[0].mxu0
        %590 = vmatprep.mubr.bf16.mxu0 %v358
        %591 = vmatmul.mubr.bf16.gmra.mrb[0].mxu0 %v357
        %v592 = vpop.f32.mrb[0].mxu0
        %v593 = vadd.f32 0.0, %v592
        %v594 = vpop.f32.mrb[0].mxu0
        %v595 = vpop.f32.mrb[0].mxu0
        %v596 = vadd.f32 0.0, %v595
        %v597 = vpop.f32.mrb[0].mxu0
        %598 = vmatprep.mubr.bf16.mxu0 %v360
        %599 = vmatmul.mubr.bf16.gmra.mrb[0].mxu0 %v359
        %v600 = vpop.f32.mrb[0].mxu0
        %v601 = vadd.f32 0.0, %v600
        %v602 = vpop.f32.mrb[0].mxu0
        %v603 = vpop.f32.mrb[0].mxu0
        %v604 = vadd.f32 0.0, %v603
        %v605 = vpop.f32.mrb[0].mxu0
        %606 = vdwg.mxu0
        %v607 = vadd.f32 %v398, %v545
        %v608 = vadd.f32 %v399, %v548
        %v609 = vadd.f32 %v400, %v553
        %v610 = vadd.f32 %v401, %v556
        %v611 = vadd.f32 %v402, %v561
        %v612 = vadd.f32 %v403, %v564
        %v613 = vadd.f32 %v404, %v569
        %v614 = vadd.f32 %v405, %v572
        %v615 = vadd.f32 %v406, %v577
        %v616 = vadd.f32 %v407, %v580
        %v617 = vadd.f32 %v408, %v585
        %v618 = vadd.f32 %v409, %v588
        %v619 = vadd.f32 %v410, %v593
        %v620 = vadd.f32 %v411, %v596
        %v621 = vadd.f32 %v412, %v601
        %v622 = vadd.f32 %v413, %v604
        %623 = vst [vmem:[#allocation2] sm:$0xff] %v607
        %624 = vst [vmem:[#allocation2 + $0x8] sm:$0xff] %v608
        %625 = vst [vmem:[#allocation2 + $0x10] sm:$0xff] %v609
        %626 = vst [vmem:[#allocation2 + $0x18] sm:$0xff] %v610
        %627 = vst [vmem:[#allocation2 + $0x20] sm:$0xff] %v611
        %628 = vst [vmem:[#allocation2 + $0x28] sm:$0xff] %v612
        %629 = vst [vmem:[#allocation2 + $0x30] sm:$0xff] %v613
        %630 = vst [vmem:[#allocation2 + $0x38] sm:$0xff] %v614
        %631 = vst [vmem:[#allocation2 + $0x40] sm:$0xff] %v615
        %632 = vst [vmem:[#allocation2 + $0x48] sm:$0xff] %v616
        %633 = vst [vmem:[#allocation2 + $0x50] sm:$0xff] %v617
        %634 = vst [vmem:[#allocation2 + $0x58] sm:$0xff] %v618
        %635 = vst [vmem:[#allocation2 + $0x60] sm:$0xff] %v619
        %636 = vst [vmem:[#allocation2 + $0x68] sm:$0xff] %v620
        %637 = vst [vmem:[#allocation2 + $0x70] sm:$0xff] %v621
        %638 = vst [vmem:[#allocation2 + $0x78] sm:$0xff] %v622
        // Predicated region
        $region57: #{tpu_custom_call.1} parent=39 // pred_check
          %p639 = pneg %p317
        $region58: #{tpu_custom_call.1} parent=39 // pred_check_branch
          %641 = sbr.rel (%p639) target = $region60
        $region59: #{tpu_custom_call.1} parent=39 // pred_region
          %v642 = vld [vmem:[#allocation2] sm:$0xff]
          %v643 = vld [vmem:[#allocation2 + $0x8] sm:$0xff]
          %v644 = vld [vmem:[#allocation2 + $0x10] sm:$0xff]
          %v645 = vld [vmem:[#allocation2 + $0x18] sm:$0xff]
          %v646 = vld [vmem:[#allocation2 + $0x20] sm:$0xff]
          %v647 = vld [vmem:[#allocation2 + $0x28] sm:$0xff]
          %v648 = vld [vmem:[#allocation2 + $0x30] sm:$0xff]
          %v649 = vld [vmem:[#allocation2 + $0x38] sm:$0xff]
          %v650 = vld [vmem:[#allocation2 + $0x40] sm:$0xff]
          %v651 = vld [vmem:[#allocation2 + $0x48] sm:$0xff]
          %v652 = vld [vmem:[#allocation2 + $0x50] sm:$0xff]
          %v653 = vld [vmem:[#allocation2 + $0x58] sm:$0xff]
          %v654 = vld [vmem:[#allocation2 + $0x60] sm:$0xff]
          %v655 = vld [vmem:[#allocation2 + $0x68] sm:$0xff]
          %v656 = vld [vmem:[#allocation2 + $0x70] sm:$0xff]
          %v657 = vld [vmem:[#allocation2 + $0x78] sm:$0xff]
          %v658 = vmax.f32 %v642, 0.0
          %v659 = vmax.f32 %v643, 0.0
          %v660 = vmax.f32 %v644, 0.0
          %v661 = vmax.f32 %v645, 0.0
          %v662 = vmax.f32 %v646, 0.0
          %v663 = vmax.f32 %v647, 0.0
          %v664 = vmax.f32 %v648, 0.0
          %v665 = vmax.f32 %v649, 0.0
          %v666 = vmax.f32 %v650, 0.0
          %v667 = vmax.f32 %v651, 0.0
          %v668 = vmax.f32 %v652, 0.0
          %v669 = vmax.f32 %v653, 0.0
          %v670 = vmax.f32 %v654, 0.0
          %v671 = vmax.f32 %v655, 0.0
          %v672 = vmax.f32 %v656, 0.0
          %v673 = vmax.f32 %v657, 0.0
          %v674 = vld [vmem:[%s280] sm:$0xf]
          %v675 = vld [vmem:[%s280 + $0x4] sm:$0xf]
          %v676 = vld [vmem:[%s280 + $0x8] sm:$0xf]
          %v677 = vld [vmem:[%s280 + $0xc] sm:$0xf]
          %v678 = vld [vmem:[%s280 + $0x10] sm:$0xf]
          %v679 = vld [vmem:[%s280 + $0x14] sm:$0xf]
          %v680 = vld [vmem:[%s280 + $0x18] sm:$0xf]
          %v681 = vld [vmem:[%s280 + $0x1c] sm:$0xf]
          %v682 = vld [vmem:[%s280 + $0x20] sm:$0xf]
          %v683 = vld [vmem:[%s280 + $0x24] sm:$0xf]
          %v684 = vld [vmem:[%s280 + $0x28] sm:$0xf]
          %v685 = vld [vmem:[%s280 + $0x2c] sm:$0xf]
          %v686 = vld [vmem:[%s280 + $0x30] sm:$0xf]
          %v687 = vld [vmem:[%s280 + $0x34] sm:$0xf]
          %v688 = vld [vmem:[%s280 + $0x38] sm:$0xf]
          %v689 = vld [vmem:[%s280 + $0x3c] sm:$0xf]
          %v690 = vunpack.c.l.bf16 %v674
          %v691 = vunpack.c.l.bf16 %v675
          %v692 = vunpack.c.l.bf16 %v676
          %v693 = vunpack.c.l.bf16 %v677
          %v694 = vunpack.c.l.bf16 %v678
          %v695 = vunpack.c.l.bf16 %v679
          %v696 = vunpack.c.l.bf16 %v680
          %v697 = vunpack.c.l.bf16 %v681
          %v698 = vunpack.c.l.bf16 %v682
          %v699 = vunpack.c.l.bf16 %v683
          %v700 = vunpack.c.l.bf16 %v684
          %v701 = vunpack.c.l.bf16 %v685
          %v702 = vunpack.c.l.bf16 %v686
          %v703 = vunpack.c.l.bf16 %v687
          %v704 = vunpack.c.l.bf16 %v688
          %v705 = vunpack.c.l.bf16 %v689
          %v706 = vadd.f32 %v658, %v690
          %v707 = vadd.f32 %v659, %v691
          %v708 = vadd.f32 %v660, %v692
          %v709 = vadd.f32 %v661, %v693
          %v710 = vadd.f32 %v662, %v694
          %v711 = vadd.f32 %v663, %v695
          %v712 = vadd.f32 %v664, %v696
          %v713 = vadd.f32 %v665, %v697
          %v714 = vadd.f32 %v666, %v698
          %v715 = vadd.f32 %v667, %v699
          %v716 = vadd.f32 %v668, %v700
          %v717 = vadd.f32 %v669, %v701
          %v718 = vadd.f32 %v670, %v702
          %v719 = vadd.f32 %v671, %v703
          %v720 = vadd.f32 %v672, %v704
          %v721 = vadd.f32 %v673, %v705
          %722 = vadd.xlane.f32.xlu0 %v706
          %v723 = vpop.xlane.xlu0 %722
          %724 = vadd.xlane.f32.xlu0 %v707
          %v725 = vpop.xlane.xlu0 %724
          %726 = vadd.xlane.f32.xlu0 %v708
          %v727 = vpop.xlane.xlu0 %726
          %728 = vadd.xlane.f32.xlu0 %v709
          %v729 = vpop.xlane.xlu0 %728
          %730 = vadd.xlane.f32.xlu0 %v710
          %v731 = vpop.xlane.xlu0 %730
          %732 = vadd.xlane.f32.xlu0 %v711
          %v733 = vpop.xlane.xlu0 %732
          %734 = vadd.xlane.f32.xlu0 %v712
          %v735 = vpop.xlane.xlu0 %734
          %736 = vadd.xlane.f32.xlu0 %v713
          %v737 = vpop.xlane.xlu0 %736
          %738 = vadd.xlane.f32.xlu0 %v714
          %v739 = vpop.xlane.xlu0 %738
          %740 = vadd.xlane.f32.xlu0 %v715
          %v741 = vpop.xlane.xlu0 %740
          %742 = vadd.xlane.f32.xlu0 %v716
          %v743 = vpop.xlane.xlu0 %742
          %744 = vadd.xlane.f32.xlu0 %v717
          %v745 = vpop.xlane.xlu0 %744
          %746 = vadd.xlane.f32.xlu0 %v718
          %v747 = vpop.xlane.xlu0 %746
          %748 = vadd.xlane.f32.xlu0 %v719
          %v749 = vpop.xlane.xlu0 %748
          %750 = vadd.xlane.f32.xlu0 %v720
          %v751 = vpop.xlane.xlu0 %750
          %752 = vadd.xlane.f32.xlu0 %v721
          %v753 = vpop.xlane.xlu0 %752
          %v754 = vrcp.pop 128.0
          %v755 = vmul.f32 %v723, %v754
          %v756 = vmul.f32 %v725, %v754
          %v757 = vmul.f32 %v727, %v754
          %v758 = vmul.f32 %v729, %v754
          %v759 = vmul.f32 %v731, %v754
          %v760 = vmul.f32 %v733, %v754
          %v761 = vmul.f32 %v735, %v754
          %v762 = vmul.f32 %v737, %v754
          %v763 = vmul.f32 %v739, %v754
          %v764 = vmul.f32 %v741, %v754
          %v765 = vmul.f32 %v743, %v754
          %v766 = vmul.f32 %v745, %v754
          %v767 = vmul.f32 %v747, %v754
          %v768 = vmul.f32 %v749, %v754
          %v769 = vmul.f32 %v751, %v754
          %v770 = vmul.f32 %v753, %v754
          %v771 = vsub.f32 %v706, %v755
          %v772 = vsub.f32 %v707, %v756
          %v773 = vsub.f32 %v708, %v757
          %v774 = vsub.f32 %v709, %v758
          %v775 = vsub.f32 %v710, %v759
          %v776 = vsub.f32 %v711, %v760
          %v777 = vsub.f32 %v712, %v761
          %v778 = vsub.f32 %v713, %v762
          %v779 = vsub.f32 %v714, %v763
          %v780 = vsub.f32 %v715, %v764
          %v781 = vsub.f32 %v716, %v765
          %v782 = vsub.f32 %v717, %v766
          %v783 = vsub.f32 %v718, %v767
          %v784 = vsub.f32 %v719, %v768
          %v785 = vsub.f32 %v720, %v769
          %v786 = vsub.f32 %v721, %v770
          %v787 = vmul.f32 %v771, %v771
          %v788 = vmul.f32 %v772, %v772
          %v789 = vmul.f32 %v773, %v773
          %v790 = vmul.f32 %v774, %v774
          %v791 = vmul.f32 %v775, %v775
          %v792 = vmul.f32 %v776, %v776
          %v793 = vmul.f32 %v777, %v777
          %v794 = vmul.f32 %v778, %v778
          %v795 = vmul.f32 %v779, %v779
          %v796 = vmul.f32 %v780, %v780
          %v797 = vmul.f32 %v781, %v781
          %v798 = vmul.f32 %v782, %v782
          %v799 = vmul.f32 %v783, %v783
          %v800 = vmul.f32 %v784, %v784
          %v801 = vmul.f32 %v785, %v785
          %v802 = vmul.f32 %v786, %v786
          %803 = vadd.xlane.f32.xlu0 %v787
          %v804 = vpop.xlane.xlu0 %803
          %805 = vadd.xlane.f32.xlu0 %v788
          %v806 = vpop.xlane.xlu0 %805
          %807 = vadd.xlane.f32.xlu0 %v789
          %v808 = vpop.xlane.xlu0 %807
          %809 = vadd.xlane.f32.xlu0 %v790
          %v810 = vpop.xlane.xlu0 %809
          %811 = vadd.xlane.f32.xlu0 %v791
          %v812 = vpop.xlane.xlu0 %811
          %813 = vadd.xlane.f32.xlu0 %v792
          %v814 = vpop.xlane.xlu0 %813
          %815 = vadd.xlane.f32.xlu0 %v793
          %v816 = vpop.xlane.xlu0 %815
          %817 = vadd.xlane.f32.xlu0 %v794
          %v818 = vpop.xlane.xlu0 %817
          %819 = vadd.xlane.f32.xlu0 %v795
          %v820 = vpop.xlane.xlu0 %819
          %821 = vadd.xlane.f32.xlu0 %v796
          %v822 = vpop.xlane.xlu0 %821
          %823 = vadd.xlane.f32.xlu0 %v797
          %v824 = vpop.xlane.xlu0 %823
          %825 = vadd.xlane.f32.xlu0 %v798
          %v826 = vpop.xlane.xlu0 %825
          %827 = vadd.xlane.f32.xlu0 %v799
          %v828 = vpop.xlane.xlu0 %827
          %829 = vadd.xlane.f32.xlu0 %v800
          %v830 = vpop.xlane.xlu0 %829
          %831 = vadd.xlane.f32.xlu0 %v801
          %v832 = vpop.xlane.xlu0 %831
          %833 = vadd.xlane.f32.xlu0 %v802
          %v834 = vpop.xlane.xlu0 %833
          %v835 = vmul.f32 %v804, %v754
          %v836 = vmul.f32 %v806, %v754
          %v837 = vmul.f32 %v808, %v754
          %v838 = vmul.f32 %v810, %v754
          %v839 = vmul.f32 %v812, %v754
          %v840 = vmul.f32 %v814, %v754
          %v841 = vmul.f32 %v816, %v754
          %v842 = vmul.f32 %v818, %v754
          %v843 = vmul.f32 %v820, %v754
          %v844 = vmul.f32 %v822, %v754
          %v845 = vmul.f32 %v824, %v754
          %v846 = vmul.f32 %v826, %v754
          %v847 = vmul.f32 %v828, %v754
          %v848 = vmul.f32 %v830, %v754
          %v849 = vmul.f32 %v832, %v754
          %v850 = vmul.f32 %v834, %v754
          %v851 = vadd.f32 %v835, 1e-05
          %v852 = vadd.f32 %v836, 1e-05
          %v853 = vadd.f32 %v837, 1e-05
          %v854 = vadd.f32 %v838, 1e-05
          %v855 = vadd.f32 %v839, 1e-05
          %v856 = vadd.f32 %v840, 1e-05
          %v857 = vadd.f32 %v841, 1e-05
          %v858 = vadd.f32 %v842, 1e-05
          %v859 = vadd.f32 %v843, 1e-05
          %v860 = vadd.f32 %v844, 1e-05
          %v861 = vadd.f32 %v845, 1e-05
          %v862 = vadd.f32 %v846, 1e-05
          %v863 = vadd.f32 %v847, 1e-05
          %v864 = vadd.f32 %v848, 1e-05
          %v865 = vadd.f32 %v849, 1e-05
          %v866 = vadd.f32 %v850, 1e-05
          %v867 = vrsqrt.pop %v851
          %v868 = vrsqrt.pop %v852
          %v869 = vrsqrt.pop %v853
          %v870 = vrsqrt.pop %v854
          %v871 = vrsqrt.pop %v855
          %v872 = vrsqrt.pop %v856
          %v873 = vrsqrt.pop %v857
          %v874 = vrsqrt.pop %v858
          %v875 = vrsqrt.pop %v859
          %v876 = vrsqrt.pop %v860
          %v877 = vrsqrt.pop %v861
          %v878 = vrsqrt.pop %v862
          %v879 = vrsqrt.pop %v863
          %v880 = vrsqrt.pop %v864
          %v881 = vrsqrt.pop %v865
          %v882 = vrsqrt.pop %v866
          %v883 = vmul.f32 %v771, %v867
          %v884 = vmul.f32 %v772, %v868
          %v885 = vmul.f32 %v773, %v869
          %v886 = vmul.f32 %v774, %v870
          %v887 = vmul.f32 %v775, %v871
          %v888 = vmul.f32 %v776, %v872
          %v889 = vmul.f32 %v777, %v873
          %v890 = vmul.f32 %v778, %v874
          %v891 = vmul.f32 %v779, %v875
          %v892 = vmul.f32 %v780, %v876
          %v893 = vmul.f32 %v781, %v877
          %v894 = vmul.f32 %v782, %v878
          %v895 = vmul.f32 %v783, %v879
          %v896 = vmul.f32 %v784, %v880
          %v897 = vmul.f32 %v785, %v881
          %v898 = vmul.f32 %v786, %v882
          %v899 = vld [vmem:[%s3] sm:$0x1]
          %v901 = vlaneseq
          %v902 = vshrl.u32 %v901, 7
          %v903 = vsub.s32 0, %v902
          %v904 = vrot.slane %v899, %v903
          %v906 = vmul.f32 %v883, %v904
          %v907 = vmul.f32 %v884, %v904
          %v908 = vmul.f32 %v885, %v904
          %v909 = vmul.f32 %v886, %v904
          %v910 = vmul.f32 %v887, %v904
          %v911 = vmul.f32 %v888, %v904
          %v912 = vmul.f32 %v889, %v904
          %v913 = vmul.f32 %v890, %v904
          %v914 = vmul.f32 %v891, %v904
          %v915 = vmul.f32 %v892, %v904
          %v916 = vmul.f32 %v893, %v904
          %v917 = vmul.f32 %v894, %v904
          %v918 = vmul.f32 %v895, %v904
          %v919 = vmul.f32 %v896, %v904
          %v920 = vmul.f32 %v897, %v904
          %v921 = vmul.f32 %v898, %v904
          %v922 = vld [vmem:[%s4] sm:$0x1]
          %v924 = vlaneseq
          %v925 = vshrl.u32 %v924, 7
          %v926 = vsub.s32 0, %v925
          %v927 = vrot.slane %v922, %v926
          %v929 = vadd.f32 %v906, %v927
          %v930 = vadd.f32 %v907, %v927
          %v931 = vadd.f32 %v908, %v927
          %v932 = vadd.f32 %v909, %v927
          %v933 = vadd.f32 %v910, %v927
          %v934 = vadd.f32 %v911, %v927
          %v935 = vadd.f32 %v912, %v927
          %v936 = vadd.f32 %v913, %v927
          %v937 = vadd.f32 %v914, %v927
          %v938 = vadd.f32 %v915, %v927
          %v939 = vadd.f32 %v916, %v927
          %v940 = vadd.f32 %v917, %v927
          %v941 = vadd.f32 %v918, %v927
          %v942 = vadd.f32 %v919, %v927
          %v943 = vadd.f32 %v920, %v927
          %v944 = vadd.f32 %v921, %v927
          %945 = vst [vmem:[%s311] sm:$0xff] %v929
          %946 = vst [vmem:[%s311 + $0x8] sm:$0xff] %v930
          %947 = vst [vmem:[%s311 + $0x10] sm:$0xff] %v931
          %948 = vst [vmem:[%s311 + $0x18] sm:$0xff] %v932
          %949 = vst [vmem:[%s311 + $0x20] sm:$0xff] %v933
          %950 = vst [vmem:[%s311 + $0x28] sm:$0xff] %v934
          %951 = vst [vmem:[%s311 + $0x30] sm:$0xff] %v935
          %952 = vst [vmem:[%s311 + $0x38] sm:$0xff] %v936
          %953 = vst [vmem:[%s311 + $0x40] sm:$0xff] %v937
          %954 = vst [vmem:[%s311 + $0x48] sm:$0xff] %v938
          %955 = vst [vmem:[%s311 + $0x50] sm:$0xff] %v939
          %956 = vst [vmem:[%s311 + $0x58] sm:$0xff] %v940
          %957 = vst [vmem:[%s311 + $0x60] sm:$0xff] %v941
          %958 = vst [vmem:[%s311 + $0x68] sm:$0xff] %v942
          %959 = vst [vmem:[%s311 + $0x70] sm:$0xff] %v943
          %960 = vst [vmem:[%s311 + $0x78] sm:$0xff] %v944
        $region60: #{tpu_custom_call.1} parent=39 // pred_fallthru
          _
        %s961 = sand.u32 %s160, 1
        %s962 = scalar_lea.sflag [#allocation5], %s961
        %s963 = sand.u32 %s160, 1
        %s964 = smul.addr %s963, 128
        %s965 = scalar_lea.vmem [#allocation9], %s964
        // Predicated region
        $region61: #{tpu_custom_call.1} parent=39 // pred_check
          %p966 = pneg %p170
        $region62: #{tpu_custom_call.1} parent=39 // pred_check_branch
          %968 = sbr.rel (%p966) target = $region64
        $region63: #{tpu_custom_call.1} parent=39 // pred_region
          %s969 = smul.u32 16, %s27
          %s971 = ssub.s32 2048, 2048
          %972 = vsyncadd %s962, %s971
          %s973 = smul.addr %s969, 128
          %s974 = scalar_lea.hbm %s5, %s973
          %s975 = sshll.u32 %s965, 4
          %s976 = int_to_ptr.vmem [resolvable:$true] %s975
          %981 = dma.vmem_to_hbm [thread:$0]  %s976, 2048, %s974, %s962, 128, 128, 8
        $region64: #{tpu_custom_call.1} parent=39 // pred_fallthru
          _
      $region40: #{tpu_custom_call.1} parent=5 // pred_fallthru
        _
      %p982 = scmp.le.s32.totalorder 2, %s18
      // Predicated region
      $region65: #{tpu_custom_call.1} parent=5 // pred_check
        %p983 = pneg %p982
      $region66: #{tpu_custom_call.1} parent=5 // pred_check_branch
        %985 = sbr.rel (%p983) target = $region68
      $region67: #{tpu_custom_call.1} parent=5 // pred_region
        %s986 = ssub.s32 %s18, 2
        // Predicated region
        $region69: #{tpu_custom_call.1} parent=67 // pred_check
          %p987 = pneg %p176
        $region70: #{tpu_custom_call.1} parent=67 // pred_check_branch
          %989 = sbr.rel (%p987) target = $region72
        $region71: #{tpu_custom_call.1} parent=67 // pred_region
          %s990 = sand.u32 %s161, 1
          %s991 = scalar_lea.sflag [#allocation5], %s990
          %s992 = sand.u32 %s161, 1
          %s993 = smul.addr %s992, 128
          %s994 = scalar_lea.vmem [#allocation9], %s993
          %995 = dma.done %s991, 2048
        $region72: #{tpu_custom_call.1} parent=67 // pred_fallthru
          _
      $region68: #{tpu_custom_call.1} parent=5 // pred_fallthru
        _
    $region6: #{tpu_custom_call.1} parent=1 // loop_footer
      %s22 = sadd.s32 1, %s18
    $region7: #{tpu_custom_call.1} parent=1 // loop_footer_branch
      %17 = sbr.rel target = $region3
    $region8: #{tpu_custom_call.1} parent=1 // loop_exit
      _
    %996 = vsyncpa [#allocation4], 1
    %s997 = scalar_lea.sflag [#allocation4], 1
    %998 = vsyncpa %s997, 1
    %999 = vsyncpa [#allocation7], 1
    %1000 = vsyncpa [#allocation5], 1
    %s1001 = scalar_lea.sflag [#allocation5], 1
    %1002 = vsyncpa %s1001, 1

</llo_original>
